<compile_context>
chip_gen: v7x
topology: tpu7x:2x2x1
jax: 0.10.0
libtpu: 0.0.40
codegen_flags: <defaults>
</compile_context>

<pallas_src>
import functools
import math

import jax
import jax.numpy as jnp
from jax import lax
from jax.experimental import pallas as pl
from jax.experimental.pallas import tpu as pltpu

_INV_SQRT2 = 1.0 / math.sqrt(2.0)
_TANH_C = math.sqrt(2.0 / math.pi)


def _round_up(x, m):
    return (x + m - 1) // m * m


def _vmem_capacity_bytes():
    """Physical VMEM per TensorCore; conservative fallback (v7x-sized) if unqueryable."""
    try:
        return int(pltpu.get_tpu_info().vmem_capacity_bytes)
    except Exception:
        return 64 << 20


def _block_spec(shape, index_map, bufs=2):
    """BlockSpec with optional non-default pipeline buffer count (graceful fallback)."""
    if bufs != 2:
        try:
            return pl.BlockSpec(shape, index_map, pipeline_mode=pl.Buffered(bufs))
        except Exception:
            pass
    return pl.BlockSpec(shape, index_map)


def _conv_gelu(x_ref, w_ref, b_ref, *, start, Kmax, TL, Cin_pad, per_tap, approx_gelu):
    """All-kernel-sizes conv + bias + GELU for one length tile.

    x_ref : (Cin_pad, Lp) resident padded NCL input (length on lanes).
    w_ref : (R, Kmax*Cin_pad) folded weights, R = num_k * Cout_pad.
    b_ref : (R, 1) bias.
    Returns f32 (R, TL)."""
    R = w_ref.shape[0]
    if per_tap:
        # Large-Cin regime: MXU is already saturated per tap -> skip building the gathered
        # operand (saves Kmax*Cin*TL of vector-store traffic), accumulate per tap in f32.
        acc = jnp.zeros((R, TL), jnp.float32)
        for t in range(Kmax):                       # static unroll (Kmax is small)
            acc = acc + jnp.dot(
                w_ref[:, t * Cin_pad:(t + 1) * Cin_pad],
                x_ref[:, pl.ds(start + t, TL)],
                preferred_element_type=jnp.float32)
        y = acc + b_ref[...]
    else:
        # Small-Cin regime: fold all taps of all kernel sizes into ONE MXU contraction.
        # G is built directly from slices of the resident input (no staging copy); every
        # tap block lands at a sublane-aligned offset because Cin_pad % 8 == 0.
        g = jnp.concatenate(
            [x_ref[:, pl.ds(start + t, TL)] for t in range(Kmax)], axis=0)
        y = jnp.dot(w_ref[...], g, preferred_element_type=jnp.float32) + b_ref[...]
    if approx_gelu:
        # tanh GELU (torch approximate='tanh'): routes most work to the otherwise-idle EUP
        y = 0.5 * y * (1.0 + jnp.tanh(_TANH_C * (y + 0.044715 * y * y * y)))
    else:
        # exact erf GELU == torch.nn.GELU() default
        y = 0.5 * y * (1.0 + lax.erf(y * _INV_SQRT2))
    return y


def _conv1d_tiled_kernel(x_ref, w_ref, b_ref, o_ref, y_scr, *,
                         Kmax, TL, Cin_pad, Cout, Cout_pad, per_tap, approx_gelu):
    """Grid (N, nLt, num_k).  x_ref: (Cin_pad, Lp) full padded sequence (resident per n),
    w_ref: (R, Kmax*Cin_pad), b_ref: (R, 1), o_ref: (Cout, TL) output tile,
    y_scr: (R, TL) out_dtype scratch holding all kernel-sizes' results for this L tile."""
    lt = pl.program_id(1)
    kk = pl.program_id(2)

    @pl.when(kk == 0)   # compute once per (n, L-tile); later kk steps only store slices
    def _():
        start = pl.multiple_of(lt * TL, TL)
        y = _conv_gelu(x_ref, w_ref, b_ref, start=start, Kmax=Kmax, TL=TL,
                       Cin_pad=Cin_pad, per_tap=per_tap, approx_gelu=approx_gelu)
        y_scr[...] = y.astype(y_scr.dtype)          # single cast; scratch is out_dtype

    # store this kernel-size's rows into its slot of the concatenated output
    row0 = pl.multiple_of(kk * Cout_pad, Cout_pad)  # sublane-aligned (Cout_pad % 8 == 0)
    o_ref[...] = y_scr[pl.ds(row0, Cout), :]


def _conv1d_full_kernel(x_ref, w_ref, b_ref, o_ref, *,
                        Kmax, L, Cin_pad, Cout, Cout_pad, num_k, per_tap, approx_gelu):
    """Fallback for genuinely small L.  Grid (N,).  o_ref: (Cout, num_k*L)."""
    y = _conv_gelu(x_ref, w_ref, b_ref, start=0, Kmax=Kmax, TL=L,
                   Cin_pad=Cin_pad, per_tap=per_tap, approx_gelu=approx_gelu)
    for kk in range(num_k):  # static unroll: place each conv along the length axis
        o_ref[:, kk * L:(kk + 1) * L] = (
            y[kk * Cout_pad:kk * Cout_pad + Cout, :].astype(o_ref.dtype))


def _estimate_vmem(TL, *, Cin_pad, Lp, R, Cout, Kmax, x_bytes, out_bytes,
                   x_bufs, w_bufs, per_tap):
    x_blk = Cin_pad * Lp * x_bytes * x_bufs
    w_blk = R * Kmax * Cin_pad * x_bytes * w_bufs
    b_blk = R * 128 * 4 * w_bufs
    y_scr = R * TL * out_bytes
    o_blk = _round_up(Cout, 8) * TL * out_bytes * 2
    if per_tap:
        interm = 2 * R * TL * 4                      # f32 accumulator + GELU temps
    else:
        interm = Kmax * Cin_pad * TL * x_bytes + 2 * R * TL * 4   # G + f32 y/GELU temps
    return x_blk + w_blk + b_blk + y_scr + o_blk + interm


def conv1d_gelu_cat_pallas(x_pad, w2, b2, *, L, Kmax, Cout, Cout_pad, num_k,
                           out_dtype, per_tap, approx_gelu):
    """x_pad: (N, Cin_pad, L + Kmax - 1) zero-padded NCL input (channels sublane-aligned).
    w2: (num_k*Cout_pad, Kmax*Cin_pad) folded weights, b2: (num_k*Cout_pad, 1) bias.
    Returns (N, Cout, num_k*L)."""
    N, Cin_pad, Lp = x_pad.shape
    assert Lp == L + Kmax - 1
    R = num_k * Cout_pad
    x_bytes = jnp.dtype(x_pad.dtype).itemsize
    out_bytes = jnp.dtype(out_dtype).itemsize

    cap = _vmem_capacity_bytes()
    plan_budget = int(cap * 0.8)
    est = functools.partial(
        _estimate_vmem, Cin_pad=Cin_pad, Lp=Lp, R=R, Cout=Cout, Kmax=Kmax,
        x_bytes=x_bytes, out_bytes=out_bytes, per_tap=per_tap)

    # lane-dense L tile (multiple of 128), largest that fits the derived VMEM budget
    TL = 0
    if L % 128 == 0:
        for cand in (2048, 1024, 512, 256, 128):
            if L % cand == 0 and est(cand, x_bufs=2, w_bufs=2) <= plan_budget:
                TL = cand
                break
        if TL == 0:
            TL = 128   # smallest lane-dense tile; may single-buffer the inputs below

    if TL:
        # Single-buffer the resident input / constant weights only when double-buffering
        # would not fit (matters on v7x's 64 MiB VMEM): their block indices are constant
        # within a batch element, so the only cost is one exposed DMA per n boundary.
        bufs = 2
        if est(TL, x_bufs=2, w_bufs=2) > plan_budget:
            bufs = 1
        need = est(TL, x_bufs=bufs, w_bufs=bufs)
        # TODO(synk): if `need` still exceeds the budget (very long sequences on v7x),
        # switch x to memory_space=pl.ANY and manually double-buffer halo'd
        # (Cin_pad, TL + Kmax - 1) windows with pltpu.make_async_copy.
        vmem_limit = int(min(cap * 0.9, max(need * 1.25 + (16 << 20), 48 << 20)))

        nLt = L // TL
        kernel = functools.partial(
            _conv1d_tiled_kernel, Kmax=Kmax, TL=TL, Cin_pad=Cin_pad, Cout=Cout,
            Cout_pad=Cout_pad, per_tap=per_tap, approx_gelu=approx_gelu)
        return pl.pallas_call(
            kernel,
            out_shape=jax.ShapeDtypeStruct((N, Cout, num_k * L), out_dtype),
            grid_spec=pltpu.PrefetchScalarGridSpec(
                num_scalar_prefetch=0,
                grid=(N, nLt, num_k),
                in_specs=[
                    # Block index depends only on n -> DMA'd once per batch element and
                    # kept resident in VMEM across the inner (lt, kk) loops.
                    _block_spec((None, Cin_pad, Lp), lambda n, lt, kk: (n, 0, 0), bufs),
                    _block_spec((R, Kmax * Cin_pad), lambda n, lt, kk: (0, 0), bufs),
                    _block_spec((R, 1), lambda n, lt, kk: (0, 0), bufs),
                ],
                out_specs=pl.BlockSpec(
                    (None, Cout, TL), lambda n, lt, kk: (n, 0, kk * nLt + lt)),
                scratch_shapes=[pltpu.VMEM((R, TL), out_dtype)],
            ),
            # NOTE: kk must stay the innermost "arbitrary" axis (y_scr carry dependency).
            compiler_params=pltpu.CompilerParams(
                dimension_semantics=("parallel", "parallel", "arbitrary"),
                vmem_limit_bytes=vmem_limit),
        )(x_pad, w2, b2)

    # fallback: genuinely small L -> one full-length output block per batch element
    need = est(L, x_bufs=2, w_bufs=2) + _round_up(Cout, 8) * num_k * L * out_bytes * 2
    vmem_limit = int(min(cap * 0.9, max(need * 1.25 + (16 << 20), 48 << 20)))
    kernel = functools.partial(
        _conv1d_full_kernel, Kmax=Kmax, L=L, Cin_pad=Cin_pad, Cout=Cout,
        Cout_pad=Cout_pad, num_k=num_k, per_tap=per_tap, approx_gelu=approx_gelu)
    return pl.pallas_call(
        kernel,
        out_shape=jax.ShapeDtypeStruct((N, Cout, num_k * L), out_dtype),
        grid_spec=pltpu.PrefetchScalarGridSpec(
            num_scalar_prefetch=0,
            grid=(N,),
            in_specs=[
                pl.BlockSpec((None, Cin_pad, Lp), lambda n: (n, 0, 0)),
                pl.BlockSpec((R, Kmax * Cin_pad), lambda n: (0, 0)),
                pl.BlockSpec((R, 1), lambda n: (0, 0)),
            ],
            out_specs=pl.BlockSpec((None, Cout, num_k * L), lambda n: (n, 0, 0)),
        ),
        compiler_params=pltpu.CompilerParams(
            dimension_semantics=("parallel",),
            vmem_limit_bytes=vmem_limit),
    )(x_pad, w2, b2)


class Conv1dPallas:
    """Pallas equivalent of the dlk Conv1d module (dropout p=0.0 -> identity)."""

    def __init__(self, in_channels, out_channels, kernel_sizes, dropout=0.0, key=None,
                 matmul_dtype=None, gelu_approximate=False):
        assert all(k % 2 == 1 for k in kernel_sizes), "the kernel sizes must be odd"
        assert out_channels % len(kernel_sizes) == 0, "out channels must be dividable by kernels"
        self.in_channels = in_channels
        self.out_per_conv = out_channels // len(kernel_sizes)
        self.kernel_sizes = list(kernel_sizes)
        self.num_k = len(self.kernel_sizes)
        self.kmax = max(self.kernel_sizes)
        self.dropout = float(dropout)
        self.gelu_approximate = bool(gelu_approximate)
        # TODO(synk): dropout is only applied as identity (p=0.0 default / eval mode);
        # training-mode p>0 dropout (pltpu.prng_*) is not implemented.
        # matmul_dtype=jnp.bfloat16 halves x/w DMA + G traffic and feeds the bf16 MXU
        # natively on v6e/v7x (f32 accumulation is kept), but deviates from the f32
        # torch reference, so the default stays f32.
        self.matmul_dtype = matmul_dtype

        mm_dtype = jnp.dtype(matmul_dtype) if matmul_dtype is not None else jnp.dtype(jnp.float32)
        sublane = max(8, 32 // mm_dtype.itemsize)         # 8 (f32) / 16 (bf16)
        self.cin_pad = _round_up(in_channels, sublane)    # sublane-aligned gather blocks
        self.cout_pad = _round_up(self.out_per_conv, 8)   # sublane-aligned per-k row blocks
        # per-tap MXU accumulation once Cin already saturates the contraction tile
        self.per_tap = self.cin_pad >= 128

        # deterministic parameter init (PyTorch nn.Conv1d default: U(-1/sqrt(fan_in), +))
        key = jax.random.PRNGKey(0) if key is None else key
        self.weights = []   # torch layout (C_out, C_in, K)
        self.biases = []    # (C_out,)
        for k in self.kernel_sizes:
            key, kw, kb = jax.random.split(key, 3)
            fan_in = in_channels * k
            bound = 1.0 / math.sqrt(fan_in)
            w = jax.random.uniform(kw, (self.out_per_conv, in_channels, k),
                                   minval=-bound, maxval=bound, dtype=jnp.float32)
            bvec = jax.random.uniform(kb, (self.out_per_conv,),
                                      minval=-bound, maxval=bound, dtype=jnp.float32)
            self.weights.append(w)
            self.biases.append(bvec)

        # Fold every conv into one (num_k*Cout_pad, Kmax*Cin_pad) matrix.  Each kernel's
        # taps are zero-padded to the shared Kmax-tap window so all convs reuse the SAME
        # gathered operand.  Cin/Cout are padded to sublane multiples so the in-kernel
        # gather and the per-kk output stores are unmasked, tile-aligned copies.
        max_pad = (self.kmax - 1) // 2
        rows, brows = [], []
        for k, w, b in zip(self.kernel_sizes, self.weights, self.biases):
            p = (k - 1) // 2
            wf = jnp.zeros((self.cout_pad, self.kmax, self.cin_pad), jnp.float32)
            # tap tt of a k-kernel reads x_maxpad[c, l + tt + (max_pad - p)]
            wf = wf.at[:self.out_per_conv, max_pad - p:max_pad - p + k, :in_channels].set(
                jnp.transpose(w, (0, 2, 1)))
            rows.append(wf.reshape(self.cout_pad, self.kmax * self.cin_pad))
            brows.append(jnp.pad(b, (0, self.cout_pad - self.out_per_conv)))
        self.w_folded = jnp.concatenate(rows, axis=0)                 # (num_k*Cout_pad, Kmax*Cin_pad)
        self.b_folded = jnp.concatenate(brows).reshape(-1, 1)         # (num_k*Cout_pad, 1)

    def __call__(self, x_ncl):
        """x_ncl: (N, C_in, L) -> (N, C_out_per_k, L * num_kernels), identical to
        torch.cat([gelu(conv_k(x)) for conv_k in convs], dim=-1)."""
        N, Cin, L = x_ncl.shape
        assert Cin == self.in_channels
        max_pad = (self.kmax - 1) // 2
        # Pad L up to a lane multiple so the lane-dense tiled kernel can be used for
        # unaligned lengths too (valid regions sliced back out below); only genuinely
        # small L uses the single full-length block fallback.
        L_run = L if (L < 128 or L % 128 == 0) else _round_up(L, 128)
        x_pad = jnp.pad(
            x_ncl,
            ((0, 0), (0, self.cin_pad - Cin), (max_pad, max_pad + (L_run - L))))
        w2 = self.w_folded
        if self.matmul_dtype is not None:
            x_pad = x_pad.astype(self.matmul_dtype)
            w2 = w2.astype(self.matmul_dtype)
        out = conv1d_gelu_cat_pallas(
            x_pad, w2, self.b_folded, L=L_run, Kmax=self.kmax,
            Cout=self.out_per_conv, Cout_pad=self.cout_pad, num_k=self.num_k,
            out_dtype=x_ncl.dtype, per_tap=self.per_tap,
            approx_gelu=self.gelu_approximate)
        if L_run != L:
            out = jnp.concatenate(
                [out[:, :, kk * L_run:kk * L_run + L] for kk in range(self.num_k)],
                axis=-1)
        return out


def _reference(x_ncl, module):
    """Pure-JAX reference (lax.conv_general_dilated) for correctness check."""
    outs = []
    for k, w, b in zip(module.kernel_sizes, module.weights, module.biases):
        pad = (k - 1) // 2
        y = lax.conv_general_dilated(
            x_ncl, w, window_strides=(1,), padding=[(pad, pad)],
            dimension_numbers=("NCH", "OIH", "NCH"))
        y = y + b.reshape(1, -1, 1)
        y = jax.nn.gelu(y, approximate=False)
        outs.append(y)
    return jnp.concatenate(outs, axis=-1)


if __name__ == "__main__":
    key = jax.random.PRNGKey(0)
    key, kx1, kx2, kx3, kp = jax.random.split(key, 5)

    N, C_in = 2, 4
    out_channels_total, kernel_sizes = 8, [3, 5]
    num_k = len(kernel_sizes)
    module = Conv1dPallas(C_in, out_channels_total, kernel_sizes, dropout=0.0, key=kp)

    # case 1: small L=16 -> full-length fallback kernel
    L1 = 16
    x1 = jax.random.normal(kx1, (N, C_in, L1), dtype=jnp.float32)
    out1 = jax.block_until_ready(module(x1))
    ref1 = _reference(x1, module)
    assert out1.shape == (N, out_channels_total // num_k, L1 * num_k), out1.shape
    assert jnp.allclose(out1, ref1, atol=1e-4, rtol=1e-4), float(jnp.max(jnp.abs(out1 - ref1)))

    # case 2: 128-aligned L=384 -> lane-dense tiled kernel (grid = (N, L tiles, num_k))
    L2 = 384
    x2 = jax.random.normal(kx2, (N, C_in, L2), dtype=jnp.float32)
    out2 = jax.block_until_ready(module(x2))
    ref2 = _reference(x2, module)
    assert out2.shape == (N, out_channels_total // num_k, L2 * num_k), out2.shape
    assert jnp.allclose(out2, ref2, atol=1e-4, rtol=1e-4), float(jnp.max(jnp.abs(out2 - ref2)))

    # case 3: unaligned L=200 >= 128 -> padded-up tiled kernel + valid-region slice
    L3 = 200
    x3 = jax.random.normal(kx3, (N, C_in, L3), dtype=jnp.float32)
    out3 = jax.block_until_ready(module(x3))
    ref3 = _reference(x3, module)
    assert out3.shape == (N, out_channels_total // num_k, L3 * num_k), out3.shape
    assert jnp.allclose(out3, ref3, atol=1e-4, rtol=1e-4), float(jnp.max(jnp.abs(out3 - ref3)))

    print("KERNEL_OK")
</pallas_src>

<mosaic_0001>
module attributes {stable_mosaic.version = 11 : i64} {
  func.func @_conv1d_full_kernel(%arg0: i32, %arg1: memref<1x8x20xf32, #tpu.memory_space<vmem>>, %arg2: memref<16x40xf32, #tpu.memory_space<vmem>>, %arg3: memref<16x1xf32, #tpu.memory_space<vmem>>, %arg4: memref<1x4x32xf32, #tpu.memory_space<vmem>>) attributes {dimension_semantics = [#tpu.dimension_semantics<parallel>], iteration_bounds = array<i64: 2>, scalar_prefetch = 0 : i64, scratch_operands = 0 : i64, tpu.core_type = #tpu.core_type<tc>, window_params = [{transform_indices = @transform_0, window_bounds = array<i64: 1, 8, 20>}, {pipeline_mode = #tpu.pipeline_mode<synchronous>, transform_indices = @transform_1, window_bounds = array<i64: 16, 40>}, {pipeline_mode = #tpu.pipeline_mode<synchronous>, transform_indices = @transform_2, window_bounds = array<i64: 16, 1>}, {transform_indices = @transform_3, window_bounds = array<i64: 1, 4, 32>}]} {
    %c0 = arith.constant 0 : index
    %c0_0 = arith.constant 0 : index
    %c0_1 = arith.constant 0 : index
    %0 = vector.load %arg1[%c0, %c0_0, %c0_1] : memref<1x8x20xf32, #tpu.memory_space<vmem>>, vector<1x8x16xf32>
    %1 = vector.shape_cast %0 : vector<1x8x16xf32> to vector<8x16xf32>
    %c0_2 = arith.constant 0 : index
    %c0_3 = arith.constant 0 : index
    %c1 = arith.constant 1 : index
    %2 = vector.load %arg1[%c0_2, %c0_3, %c1] : memref<1x8x20xf32, #tpu.memory_space<vmem>>, vector<1x8x16xf32>
    %3 = vector.shape_cast %2 : vector<1x8x16xf32> to vector<8x16xf32>
    %c0_4 = arith.constant 0 : index
    %c0_5 = arith.constant 0 : index
    %c2 = arith.constant 2 : index
    %4 = vector.load %arg1[%c0_4, %c0_5, %c2] : memref<1x8x20xf32, #tpu.memory_space<vmem>>, vector<1x8x16xf32>
    %5 = vector.shape_cast %4 : vector<1x8x16xf32> to vector<8x16xf32>
    %c0_6 = arith.constant 0 : index
    %c0_7 = arith.constant 0 : index
    %c3 = arith.constant 3 : index
    %6 = vector.load %arg1[%c0_6, %c0_7, %c3] : memref<1x8x20xf32, #tpu.memory_space<vmem>>, vector<1x8x16xf32>
    %7 = vector.shape_cast %6 : vector<1x8x16xf32> to vector<8x16xf32>
    %c0_8 = arith.constant 0 : index
    %c0_9 = arith.constant 0 : index
    %c4 = arith.constant 4 : index
    %8 = vector.load %arg1[%c0_8, %c0_9, %c4] : memref<1x8x20xf32, #tpu.memory_space<vmem>>, vector<1x8x16xf32>
    %9 = vector.shape_cast %8 : vector<1x8x16xf32> to vector<8x16xf32>
    %10 = tpu.concatenate %1, %3, %5, %7, %9 in 0 : vector<8x16xf32>, vector<8x16xf32>, vector<8x16xf32>, vector<8x16xf32>, vector<8x16xf32> -> vector<40x16xf32>
    %c0_10 = arith.constant 0 : index
    %c0_11 = arith.constant 0 : index
    %11 = vector.load %arg2[%c0_10, %c0_11] : memref<16x40xf32, #tpu.memory_space<vmem>>, vector<16x40xf32>
    %cst = arith.constant dense<0.000000e+00> : vector<16x16xf32>
    %12 = tpu.matmul %11, %10, %cst {dimension_numbers = #tpu.dot_dimension_numbers<[1], [0], [0], [1], [0, 0, 1, 1], [], []>} : vector<16x40xf32>, vector<40x16xf32>, vector<16x16xf32> -> vector<16x16xf32>
    %c0_12 = arith.constant 0 : index
    %c0_13 = arith.constant 0 : index
    %13 = vector.load %arg3[%c0_12, %c0_13] : memref<16x1xf32, #tpu.memory_space<vmem>>, vector<16x1xf32>
    %14 = vector.broadcast %13 : vector<16x1xf32> to vector<16x16xf32>
    %15 = arith.addf %12, %14 : vector<16x16xf32>
    %cst_14 = arith.constant 5.000000e-01 : f32
    %16 = vector.broadcast %cst_14 : f32 to vector<16x16xf32>
    %17 = arith.mulf %16, %15 : vector<16x16xf32>
    %cst_15 = arith.constant 0.707106769 : f32
    %18 = vector.broadcast %cst_15 : f32 to vector<16x16xf32>
    %19 = arith.mulf %15, %18 : vector<16x16xf32>
    %20 = math.erf %19 : vector<16x16xf32>
    %cst_16 = arith.constant 1.000000e+00 : f32
    %21 = vector.broadcast %cst_16 : f32 to vector<16x16xf32>
    %22 = arith.addf %21, %20 : vector<16x16xf32>
    %23 = arith.mulf %17, %22 : vector<16x16xf32>
    %24 = vector.extract_strided_slice %23 {offsets = [0, 0], sizes = [4, 16], strides = [1, 1]} : vector<16x16xf32> to vector<4x16xf32>
    %c0_17 = arith.constant 0 : index
    %c0_18 = arith.constant 0 : index
    %c0_19 = arith.constant 0 : index
    %25 = vector.load %arg4[%c0_17, %c0_18, %c0_19] : memref<1x4x32xf32, #tpu.memory_space<vmem>>, vector<1x4x16xf32>
    %26 = vector.shape_cast %25 : vector<1x4x16xf32> to vector<4x16xf32>
    %27 = vector.shape_cast %24 : vector<4x16xf32> to vector<1x4x16xf32>
    tpu.vector_store %arg4[%c0_17, %c0_18, %c0_19], %27 {strides = array<i32>} : memref<1x4x32xf32, #tpu.memory_space<vmem>>, vector<1x4x16xf32>,
    %28 = vector.extract_strided_slice %23 {offsets = [8, 0], sizes = [4, 16], strides = [1, 1]} : vector<16x16xf32> to vector<4x16xf32>
    %c0_20 = arith.constant 0 : index
    %c0_21 = arith.constant 0 : index
    %c16 = arith.constant 16 : index
    %29 = vector.load %arg4[%c0_20, %c0_21, %c16] : memref<1x4x32xf32, #tpu.memory_space<vmem>>, vector<1x4x16xf32>
    %30 = vector.shape_cast %29 : vector<1x4x16xf32> to vector<4x16xf32>
    %31 = vector.shape_cast %28 : vector<4x16xf32> to vector<1x4x16xf32>
    tpu.vector_store %arg4[%c0_20, %c0_21, %c16], %31 {strides = array<i32>} : memref<1x4x32xf32, #tpu.memory_space<vmem>>, vector<1x4x16xf32>,
    return
  }
  func.func @transform_0(%arg0: i32) -> (i32, i32, i32) {
    %c0_i32 = arith.constant 0 : i32
    %c0_i32_0 = arith.constant 0 : i32
    %c0_i32_1 = arith.constant 0 : i32
    return %arg0, %c0_i32, %c0_i32_0 : i32, i32, i32
  }
  func.func @transform_1(%arg0: i32) -> (i32, i32) {
    %c0_i32 = arith.constant 0 : i32
    %c0_i32_0 = arith.constant 0 : i32
    %c0_i32_1 = arith.constant 0 : i32
    return %c0_i32, %c0_i32_0 : i32, i32
  }
  func.func @transform_2(%arg0: i32) -> (i32, i32) {
    %c0_i32 = arith.constant 0 : i32
    %c0_i32_0 = arith.constant 0 : i32
    %c0_i32_1 = arith.constant 0 : i32
    return %c0_i32, %c0_i32_0 : i32, i32
  }
  func.func @transform_3(%arg0: i32) -> (i32, i32, i32) {
    %c0_i32 = arith.constant 0 : i32
    %c0_i32_0 = arith.constant 0 : i32
    %c0_i32_1 = arith.constant 0 : i32
    return %arg0, %c0_i32, %c0_i32_0 : i32, i32, i32
  }
}

</mosaic_0001>

<llo_original>
// kernel: tpu_custom_call.1
$region0: #{tpu_custom_call.1}
  #allocation0 [shape = 'u32[]', space=smem, size = 0x4, offset = 0x4, fixed_abs, tag = 'smem constant byte address 0x4 - core index']
  #allocation1 [shape = 'u32[144,128]{1,0:T(1,128)}', space=vmem, size = 0x12000, scoped, tag = 'internal scratch']
  %s0 = inlined_call_operand.vmem [shape: f32[2,8,20], index: 0, kind: input, shape index: {}]
  %s1 = inlined_call_operand.hbm [shape: f32[16,40], index: 1, kind: input, shape index: {}]
  %s2 = inlined_call_operand.vmem [shape: f32[16,1], index: 2, kind: input, shape index: {}]
  %s3 = inlined_call_operand.hbm [shape: f32[2,4,32], index: 3, kind: output, shape index: {}]
  %s4 = sld [smem:[#allocation0]]
  $region49: #{tpu_custom_call.1} parent=0
    _
  %s6 = ssub.s32 1, %s4
  %s7 = scalar_select 0, %s6, %s4
  $region1: #{tpu_custom_call.1} parent=0
    #allocation2 [shape = 'u8[8192]{0}', space=vmem, size = 0x2000, scoped, tag = 'input window, operand 1, single buffered']
    #allocation3 [shape = 's32[2]{0}', space=sflag, size = 0x8, scoped, tag = 'scoped memory for tpu_custom_call.1']
    #allocation4 [shape = 's32[2]{0}', space=sflag, size = 0x8, scoped, tag = 'scoped memory for tpu_custom_call.1']
    #allocation5 [shape = 'u8[4096]{0}', space=vmem, size = 0x1000, scoped, tag = 'output window, operand 0']
    %8 = vsyncpa [#allocation3], 0
    %9 = vsyncpa [#allocation4], 0
    %s10 = scalar_lea.sflag [#allocation4], 1
    %11 = vsyncpa %s10, 0
    loop: start=0, step=1, limit=4
    $region2: #{tpu_custom_call.1} parent=1 // loop_pre_header
      _
    $region3: #{tpu_custom_call.1} parent=1 // loop_header
      %s13 = sphi 0, %s17
      %p14 = scmp.ge.s32.totalorder %s13, 4
      %s23 = sphi 0, %s25
      %s26 = sphi 0, %s23
      %s27 = sphi 0, %s26
      %s43 = sphi 0, %s27
      %s47 = sphi 0, %s47
      %s49 = sphi 0, %s47
      %s50 = sphi 0, %s49
      %s64 = sphi 0, %s50
      %s68 = sphi 0, %s68
      %s70 = sphi 0, %s68
      %s71 = sphi 0, %s70
      %s85 = sphi 0, %s71
      %s91 = sphi 0, %s93
      %s94 = sphi 0, %s91
      %s95 = sphi 0, %s94
      %s111 = sphi 0, %s95
    $region4: #{tpu_custom_call.1} parent=1 // loop_header_branch
      %16 = sbr.rel (%p14) target = $region8
    $region5: #{tpu_custom_call.1} parent=1 // loop_body
      %s18 = ssub.s32 %s13, 1
      %s19 = ssub.s32 %s13, 2
      %s20 = sadd.s32 %s13, 1
      %s21 = ssub.s32 %s13, %s20
      %p22 = scmp.eq.s32.totalorder %s21, 0
      %s24 = sadd.s32 %s23, 1
      %s25 = scalar_select %p22, %s23, %s24
      %p28 = pneg %p22
      %p29 = scmp.eq.s32.totalorder %s13, 1
      %p30 = por %p28, %p29
      %p31 = scmp.ne.s32.totalorder %s23, %s26
      %p32 = scmp.eq.s32.totalorder %s13, 0
      %p33 = por %p31, %p32
      %p34 = scmp.ne.s32.totalorder %s23, %s26
      %p35 = scmp.eq.s32.totalorder %s18, 1
      %p36 = por %p34, %p35
      %p37 = scmp.ne.s32.totalorder %s26, %s27
      %p38 = scmp.eq.s32.totalorder %s18, 0
      %p39 = por %p37, %p38
      %p40 = scmp.ne.s32.totalorder %s26, %s27
      %p41 = scmp.eq.s32.totalorder %s19, 1
      %p42 = por %p40, %p41
      %p44 = scmp.ne.s32.totalorder %s27, %s43
      %p45 = scmp.eq.s32.totalorder %s19, 0
      %p46 = por %p44, %p45
      %s48 = sadd.s32 %s47, 1
      %p51 = scmp.eq.s32.totalorder %s13, 1
      %p52 = scmp.ne.s32.totalorder %s47, %s49
      %p53 = scmp.eq.s32.totalorder %s13, 0
      %p54 = por %p52, %p53
      %p55 = scmp.ne.s32.totalorder %s47, %s49
      %p56 = scmp.eq.s32.totalorder %s18, 1
      %p57 = por %p55, %p56
      %p58 = scmp.ne.s32.totalorder %s49, %s50
      %p59 = scmp.eq.s32.totalorder %s18, 0
      %p60 = por %p58, %p59
      %p61 = scmp.ne.s32.totalorder %s49, %s50
      %p62 = scmp.eq.s32.totalorder %s19, 1
      %p63 = por %p61, %p62
      %p65 = scmp.ne.s32.totalorder %s50, %s64
      %p66 = scmp.eq.s32.totalorder %s19, 0
      %p67 = por %p65, %p66
      %s69 = sadd.s32 %s68, 1
      %p72 = scmp.eq.s32.totalorder %s13, 1
      %p73 = scmp.ne.s32.totalorder %s68, %s70
      %p74 = scmp.eq.s32.totalorder %s13, 0
      %p75 = por %p73, %p74
      %p76 = scmp.ne.s32.totalorder %s68, %s70
      %p77 = scmp.eq.s32.totalorder %s18, 1
      %p78 = por %p76, %p77
      %p79 = scmp.ne.s32.totalorder %s70, %s71
      %p80 = scmp.eq.s32.totalorder %s18, 0
      %p81 = por %p79, %p80
      %p82 = scmp.ne.s32.totalorder %s70, %s71
      %p83 = scmp.eq.s32.totalorder %s19, 1
      %p84 = por %p82, %p83
      %p86 = scmp.ne.s32.totalorder %s71, %s85
      %p87 = scmp.eq.s32.totalorder %s19, 0
      %p88 = por %p86, %p87
      %s89 = ssub.s32 %s13, %s20
      %p90 = scmp.eq.s32.totalorder %s89, 0
      %s92 = sadd.s32 %s91, 1
      %s93 = scalar_select %p90, %s91, %s92
      %p96 = pneg %p90
      %p97 = scmp.eq.s32.totalorder %s13, 1
      %p98 = por %p96, %p97
      %p99 = scmp.ne.s32.totalorder %s91, %s94
      %p100 = scmp.eq.s32.totalorder %s13, 0
      %p101 = por %p99, %p100
      %p102 = scmp.ne.s32.totalorder %s91, %s94
      %p103 = scmp.eq.s32.totalorder %s18, 1
      %p104 = por %p102, %p103
      %p105 = scmp.ne.s32.totalorder %s94, %s95
      %p106 = scmp.eq.s32.totalorder %s18, 0
      %p107 = por %p105, %p106
      %p108 = scmp.ne.s32.totalorder %s94, %s95
      %p109 = scmp.eq.s32.totalorder %s19, 1
      %p110 = por %p108, %p109
      %p112 = scmp.ne.s32.totalorder %s95, %s111
      %p113 = scmp.eq.s32.totalorder %s19, 0
      %p114 = por %p112, %p113
      %p115 = scmp.le.s32.totalorder 1, %s13
      %p116 = scmp.lt.s32.totalorder %s13, 3
      %p117 = pnand %p115, %p116
      %p118 = pneg %p117
      // Predicated region
      $region9: #{tpu_custom_call.1} parent=5 // pred_check
        _
      $region10: #{tpu_custom_call.1} parent=5 // pred_check_branch
        %120 = sbr.rel (%p117) target = $region12
      $region11: #{tpu_custom_call.1} parent=5 // pred_region
        %s121 = ssub.s32 %s13, 1
        // Predicated region
        $region13: #{tpu_custom_call.1} parent=11 // pred_check
          %p122 = pneg %p60
        $region14: #{tpu_custom_call.1} parent=11 // pred_check_branch
          %124 = sbr.rel (%p122) target = $region16
        $region15: #{tpu_custom_call.1} parent=11 // pred_region
          %s126 = ssub.s32 256, 256
          %127 = vsyncadd [#allocation3], %s126
          %s128 = sshll.u32 [#allocation2], 4
          %s129 = int_to_ptr.vmem [resolvable:$true] %s128
          %134 = dma.hbm_to_vmem [thread:$0]  %s1, 256, %s129, [#allocation3], 128, 128, 8
        $region16: #{tpu_custom_call.1} parent=11 // pred_fallthru
          _
        // Predicated region
        $region17: #{tpu_custom_call.1} parent=11 // pred_check
          %p135 = pneg %p81
        $region18: #{tpu_custom_call.1} parent=11 // pred_check_branch
          %137 = sbr.rel (%p135) target = $region20
        $region19: #{tpu_custom_call.1} parent=11 // pred_region
          _
        $region20: #{tpu_custom_call.1} parent=11 // pred_fallthru
          _
      $region12: #{tpu_custom_call.1} parent=5 // pred_fallthru
        _
      %p138 = scmp.lt.s32.totalorder %s13, 2
      // Predicated region
      $region21: #{tpu_custom_call.1} parent=5 // pred_check
        %p139 = pneg %p138
      $region22: #{tpu_custom_call.1} parent=5 // pred_check_branch
        %141 = sbr.rel (%p139) target = $region24
      $region23: #{tpu_custom_call.1} parent=5 // pred_region
        // Predicated region
        $region25: #{tpu_custom_call.1} parent=23 // pred_check
          %p142 = pneg %p33
        $region26: #{tpu_custom_call.1} parent=23 // pred_check_branch
          %144 = sbr.rel (%p142) target = $region28
        $region27: #{tpu_custom_call.1} parent=23 // pred_region
          %p145 = scmp.lt.s32.totalorder %s13, 1
          %s146 = scalar_select %p145, %s13, 1
          %s147 = smul.addr %s146, 8
          %s148 = scalar_lea.vmem %s0, %s147
        $region28: #{tpu_custom_call.1} parent=23 // pred_fallthru
          _
      $region24: #{tpu_custom_call.1} parent=5 // pred_fallthru
        _
      %p149 = scmp.le.s32.totalorder 1, %s13
      %p150 = scmp.lt.s32.totalorder %s13, 3
      %p151 = pnand %p149, %p150
      %p152 = pneg %p151
      // Predicated region
      $region29: #{tpu_custom_call.1} parent=5 // pred_check
        _
      $region30: #{tpu_custom_call.1} parent=5 // pred_check_branch
        %154 = sbr.rel (%p151) target = $region32
      $region31: #{tpu_custom_call.1} parent=5 // pred_region
        %s155 = ssub.s32 %s13, 1
        // Predicated region
        $region33: #{tpu_custom_call.1} parent=31 // pred_check
          %p156 = pneg %p60
        $region34: #{tpu_custom_call.1} parent=31 // pred_check_branch
          %158 = sbr.rel (%p156) target = $region36
        $region35: #{tpu_custom_call.1} parent=31 // pred_region
          %159 = dma.done [#allocation3], 256
        $region36: #{tpu_custom_call.1} parent=31 // pred_fallthru
          _
        %p160 = scmp.lt.s32.totalorder %s18, 1
        %s161 = scalar_select %p160, %s18, 1
        %s162 = smul.addr %s161, 8
        %s163 = scalar_lea.vmem %s0, %s162
        %p164 = pneg %p39
        %p165 = pneg %p36
        %p166 = pneg %p60
        %p167 = pneg %p57
        %p168 = pneg %p81
        %p169 = pneg %p78
        %p170 = pneg %p107
        %p171 = pneg %p104
        %s172 = sand.u32 %s94, 1
        %s173 = scalar_lea.sflag [#allocation4], %s172
        %s174 = sand.u32 %s94, 1
        %s175 = smul.addr %s174, 4
        %s176 = scalar_lea.vmem [#allocation5], %s175
        %p177 = scmp.lt.s32.totalorder %s18, 1
        %s178 = scalar_select %p177, %s18, 1
        %s179 = smul.addr %s178, 8
        %s180 = scalar_lea.vmem %s0, %s179
        %v181 = vld [vmem:[%s180] sm:$0xff]
        %183 = vrot.lane.b32.xlu0 %v181, 127
        %v184 = vpop.permute.xlu0 %183
        %186 = vrot.lane.b32.xlu0 %v181, 126
        %v187 = vpop.permute.xlu0 %186
        %189 = vrot.lane.b32.xlu0 %v181, 125
        %v190 = vpop.permute.xlu0 %189
        %192 = vrot.lane.b32.xlu0 %v181, 124
        %v193 = vpop.permute.xlu0 %192
        %v195 = vld [vmem:[#allocation2] sm:$0xff]
        %v196 = vld [vmem:[#allocation2 + $0x8] sm:$0xff]
        %v197 = vld [vmem:[%s2] sm:$0xff]
        %v198 = vld [vmem:[%s2 + $0x8] sm:$0xff]
        %200 = vset.pattern.permute.xlu0 0
        %201 = vperm.xlu0 %200, %v197
        %v202 = vpop.permute.xlu0 %201
        %205 = vset.pattern.permute.xlu0 0
        %206 = vperm.xlu0 %205, %v198
        %v207 = vpop.permute.xlu0 %206
        %vm209 = vcmask 326656
        %v211 = vsel %vm209, %v195, 0
        %v214 = vsel %vm209, %v196, 0
        %216 = vmatprep.subr.mxu0 0.0
        %217 = vmatpush1.msra.mxu0 %v181
        %218 = vmatprep.subr.mxu0 0.0
        %219 = vmatpush1.msra.mxu0 %v184
        %220 = vmatprep.subr.mxu0 0.0
        %221 = vmatpush1.msra.mxu0 %v187
        %222 = vmatprep.subr.mxu0 0.0
        %223 = vmatpush1.msra.mxu0 %v190
        %224 = vmatprep.subr.mxu0 0.0
        %225 = vmatpush1.msra.mxu0 %v193
        %226 = vmatprep.subr.mxu0 0.0
        %227 = vmatpush1.msra.mxu0 0.0
        %228 = vmatprep.subr.mxu0 0.0
        %229 = vmatpush1.msra.mxu0 0.0
        %230 = vmatprep.subr.mxu0 0.0
        %231 = vmatpush1.msra.mxu0 0.0
        %232 = vmatprep.subr.mxu0 0.0
        %233 = vmatpush1.msra.mxu0 0.0
        %234 = vmatprep.subr.mxu0 0.0
        %235 = vmatpush1.msra.mxu0 0.0
        %236 = vmatprep.subr.mxu0 0.0
        %237 = vmatpush1.msra.mxu0 0.0
        %238 = vmatprep.subr.mxu0 0.0
        %239 = vmatpush1.msra.mxu0 0.0
        %240 = vmatprep.subr.mxu0 0.0
        %241 = vmatpush1.msra.mxu0 0.0
        %242 = vmatprep.subr.mxu0 0.0
        %243 = vmatpush1.msra.mxu0 0.0
        %244 = vmatprep.subr.mxu0 0.0
        %245 = vmatpush1.msra.mxu0 0.0
        %246 = vmatprep.subr.mxu0 0.0
        %247 = vmatpush1.msra.mxu0 0.0
        %248 = vmatprep.subr.mxu0 0.0
        %249 = vmatpush1.msra.mxu0 0.0
        %250 = vmatprep.subr.mxu0 0.0
        %251 = vmatpush1.msra.mxu0 0.0
        %252 = vmatprep.subr.mxu0 0.0
        %253 = vmatpush1.msra.mxu0 0.0
        %254 = vmatprep.subr.mxu0 0.0
        %255 = vmatpush1.msra.mxu0 0.0
        %256 = vmatprep.subr.mxu0 0.0
        %257 = vmatpush1.msra.mxu0 0.0
        %258 = vmatprep.subr.mxu0 0.0
        %259 = vmatpush1.msra.mxu0 0.0
        %260 = vmatprep.subr.mxu0 0.0
        %261 = vmatpush1.msra.mxu0 0.0
        %262 = vmatprep.subr.mxu0 0.0
        %263 = vmatpush1.msra.mxu0 0.0
        %264 = vmatprep.subr.mxu0 0.0
        %265 = vmatpush1.msra.mxu0 0.0
        %266 = vmatprep.subr.mxu0 0.0
        %267 = vmatpush1.msra.mxu0 0.0
        %268 = vmatprep.subr.mxu0 0.0
        %269 = vmatpush1.msra.mxu0 0.0
        %270 = vmatprep.subr.mxu0 0.0
        %271 = vmatpush1.msra.mxu0 0.0
        %272 = vmatprep.subr.mxu0 0.0
        %273 = vmatpush1.msra.mxu0 0.0
        %274 = vmatprep.subr.mxu0 0.0
        %275 = vmatpush1.msra.mxu0 0.0
        %276 = vmatprep.subr.mxu0 0.0
        %277 = vmatpush1.msra.mxu0 0.0
        %278 = vmatprep.subr.mxu0 0.0
        %279 = vmatpush1.msra.mxu0 0.0
        %280 = vmatprep.mubr.f32.mxu0 0.0
        %281 = vmatmul.mubr.f32.gmra.mrb[0].mxu0 %v211
        %v282 = vpop.f32.mrb[0].mxu0
        %v283 = vadd.f32 %v202, %v282
        %v284 = vpop.f32.mrb[0].mxu0
        %285 = vmatprep.mubr.f32.mxu0 0.0
        %286 = vmatmul.mubr.f32.gmra.mrb[0].mxu0 %v214
        %v287 = vpop.f32.mrb[0].mxu0
        %v288 = vadd.f32 %v207, %v287
        %v289 = vpop.f32.mrb[0].mxu0
        %290 = vdwg.mxu0
        %v291 = vmul.f32 %v283, 0.5
        %v292 = vmul.f32 %v288, 0.5
        %v293 = vmul.f32 %v283, 0.70710677
        %v294 = vmul.f32 %v288, 0.70710677
        %v295 = verf.f32.pop %v293
        %v296 = verf.f32.pop %v294
        %v297 = vadd.f32 %v295, 1.0
        %v298 = vadd.f32 %v296, 1.0
        %v299 = vmul.f32 %v291, %v297
        %v300 = vmul.f32 %v292, %v298
        %vm301 = vcmask 125952
        %302 = vst.msk [vmem:[%s176] sm:$0xf] %vm301, %v299
        %304 = vrot.lane.b32.xlu0 %v300, 16
        %v305 = vpop.permute.xlu0 %304
        %vm307 = vcmask 257152
        %308 = vst.msk [vmem:[%s176] sm:$0xf] %vm307, %v305
        %s309 = sand.u32 %s94, 1
        %s310 = scalar_lea.sflag [#allocation4], %s309
        %s311 = sand.u32 %s94, 1
        %s312 = smul.addr %s311, 4
        %s313 = scalar_lea.vmem [#allocation5], %s312
        // Predicated region
        $region37: #{tpu_custom_call.1} parent=31 // pred_check
          %p314 = pneg %p104
        $region38: #{tpu_custom_call.1} parent=31 // pred_check_branch
          %316 = sbr.rel (%p314) target = $region40
        $region39: #{tpu_custom_call.1} parent=31 // pred_region
          %s318 = ssub.s32 64, 64
          %319 = vsyncadd %s310, %s318
          %s320 = smul.addr %s18, 64
          %s321 = scalar_lea.hbm %s3, %s320
          %s323 = sshll.u32 %s313, 4
          %s324 = int_to_ptr.vmem [resolvable:$true] %s323
          %326 = dma.vmem_to_hbm [thread:$0]  %s324, 64, %s321, %s310
        $region40: #{tpu_custom_call.1} parent=31 // pred_fallthru
          _
      $region32: #{tpu_custom_call.1} parent=5 // pred_fallthru
        _
      %p327 = scmp.le.s32.totalorder 2, %s13
      // Predicated region
      $region41: #{tpu_custom_call.1} parent=5 // pred_check
        %p328 = pneg %p327
      $region42: #{tpu_custom_call.1} parent=5 // pred_check_branch
        %330 = sbr.rel (%p328) target = $region44
      $region43: #{tpu_custom_call.1} parent=5 // pred_region
        %s331 = ssub.s32 %s13, 2
        // Predicated region
        $region45: #{tpu_custom_call.1} parent=43 // pred_check
          %p332 = pneg %p110
        $region46: #{tpu_custom_call.1} parent=43 // pred_check_branch
          %334 = sbr.rel (%p332) target = $region48
        $region47: #{tpu_custom_call.1} parent=43 // pred_region
          %s335 = sand.u32 %s95, 1
          %s336 = scalar_lea.sflag [#allocation4], %s335
          %s337 = sand.u32 %s95, 1
          %s338 = smul.addr %s337, 4
          %s339 = scalar_lea.vmem [#allocation5], %s338
          %340 = dma.done %s336, 64
        $region48: #{tpu_custom_call.1} parent=43 // pred_fallthru
          _
      $region44: #{tpu_custom_call.1} parent=5 // pred_fallthru
        _
    $region6: #{tpu_custom_call.1} parent=1 // loop_footer
      %s17 = sadd.s32 1, %s13
    $region7: #{tpu_custom_call.1} parent=1 // loop_footer_branch
      %12 = sbr.rel target = $region3
    $region8: #{tpu_custom_call.1} parent=1 // loop_exit
      _
    %341 = vsyncpa [#allocation3], 1
    %s342 = scalar_lea.sflag [#allocation3], 1
    %343 = vsyncpa %s342, 1
    %344 = vsyncpa [#allocation4], 1
    %s345 = scalar_lea.sflag [#allocation4], 1
    %346 = vsyncpa %s345, 1

</llo_original>
